<compile_context>
chip_gen: v5e
topology: v5e:2x2
jax: 0.10.0
libtpu: 0.0.40
codegen_flags: <defaults>
</compile_context>

<pallas_src>
import functools

import jax
import jax.numpy as jnp
from jax.experimental import pallas as pl
from jax.experimental.pallas import tpu as pltpu


def _pixel_shuffle_kernel(x_ref, pc_ref, o_ref):
    # x_ref : (1, c_blk, r*r, h_blk, W)   source planes for this step
    # pc_ref: (r*r, W, r*r*W)             one-hot lane permutation, split by k
    # o_ref : (1, c_blk, h_blk, r*r*W)    lane-dense output rows
    _, c_blk, rr, h_blk, w = x_ref.shape
    n = o_ref.shape[-1]

    acc = jnp.zeros((c_blk * h_blk, n), jnp.float32)
    for k in range(rr):  # r*r is small (4, 9, ...) -> bounded unroll
        if c_blk == 1:
            xk = x_ref[0, 0, k, :, :]                              # (h_blk, W)
        else:
            # Tile-aligned merge (chooser guarantees h_blk % sublane_tile == 0):
            xk = x_ref[0, :, k, :, :].reshape(c_blk * h_blk, w)    # (M, W)
        # Exact 0/1 permutation matmul; HIGHEST keeps f32 bit-exact on the MXU.
        acc = acc + jnp.dot(xk, pc_ref[k],
                            preferred_element_type=jnp.float32,
                            precision=jax.lax.Precision.HIGHEST)
    o_ref[...] = acc.reshape(o_ref.shape).astype(o_ref.dtype)


def _make_perm(W, r, dtype):
    """P[k, w, q] = 1  iff  dense output column q sources plane k, column w.

    Dense column q encodes (i, w, j) via q = i*(W*r) + w*r + j and sources
    plane k = i*r + j, so one matmul produces rows already laid out as the
    final (r, W*r) output rows flattened along lanes."""
    N = r * r * W
    q = jnp.arange(N)
    i = q // (W * r)
    j = q % r
    w_src = (q % (W * r)) // r
    k_src = i * r + j
    kk = jnp.arange(r * r)[:, None, None]
    ww = jnp.arange(W)[None, :, None]
    return ((kk == k_src[None, None, :]) &
            (ww == w_src[None, None, :])).astype(dtype)


def _vmem_params():
    """(per-step tile budget, vmem_limit_bytes) by TPU generation."""
    kind = jax.devices()[0].device_kind.lower()
    if ("v5" in kind) or ("v6" in kind):
        return 24 << 20, 96 << 20          # 128 MiB VMEM parts: bigger tiles
    return 10 << 20, 32 << 20              # v7x (64 MiB) / unknown: conservative


def _sublane_tile(itemsize):
    return 8 * max(1, 4 // itemsize)       # f32: 8, bf16/f16: 16


def _choose_blocks(B, C_out, H, W, r, itemsize, budget_bytes):
    """Pick (c_blk, h_blk): big tiles within a padded VMEM budget, but keep
    several grid steps alive for megacore sharding / pipelining."""
    N = r * r * W
    sub = _sublane_tile(itemsize)

    def pad(x, m):
        return -(-x // m) * m

    def step_bytes(c_blk, h_blk):
        inp = c_blk * r * r * pad(h_blk, sub) * pad(W, 128) * itemsize
        out = c_blk * pad(h_blk, sub) * pad(N, 128) * itemsize
        pc = r * r * pad(W, sub) * pad(N, 128) * itemsize
        acc = pad(c_blk * h_blk, 8) * pad(N, 128) * 4
        # double-buffered in/out + double-buffered pc + accumulator headroom
        return 2 * (inp + out) + 2 * pc + 2 * acc

    # Legal block extents under the (8,128) rule: second-minor divisible by 8
    # or equal to the full dimension.
    h_divs = sorted({d for d in range(1, H + 1)
                     if H % d == 0 and (d % 8 == 0 or d == H)})
    c_divs = sorted(d for d in range(1, C_out + 1) if C_out % d == 0)

    target_steps = 8
    best_key, best = None, (1, h_divs[0])  # min-footprint legal fallback
    for h_blk in h_divs:
        for c_blk in c_divs:
            if c_blk > 8:
                continue                   # bound in-kernel unrolling
            if c_blk > 1 and h_blk % sub != 0:
                continue                   # keep the (c,h)->(c*h) merge aligned
            if step_bytes(c_blk, h_blk) > budget_bytes:
                continue
            steps = B * (C_out // c_blk) * (H // h_blk)
            # Prefer enough steps to feed both TCs / the pipeline, then the
            # biggest tile (favoring tall h_blk).
            key = (min(steps, target_steps), c_blk * h_blk, h_blk)
            if best_key is None or key > best_key:
                best_key, best = key, (c_blk, h_blk)
    return best


@functools.lru_cache(maxsize=None)
def _build_pixel_shuffle(B, C_out, H, W, r, dtype, c_blk, h_blk, vmem_limit):
    N = r * r * W
    grid = (B, C_out // c_blk, H // h_blk)
    itemsize = jnp.dtype(dtype).itemsize
    io_bytes = 2 * B * C_out * r * r * H * W * itemsize + r * r * W * N * itemsize
    flops = 2 * B * C_out * r * r * H * W * N
    return pl.pallas_call(
        _pixel_shuffle_kernel,
        out_shape=jax.ShapeDtypeStruct((B, C_out, H, N), dtype),
        grid_spec=pltpu.PrefetchScalarGridSpec(
            num_scalar_prefetch=0,
            grid=grid,
            in_specs=[
                pl.BlockSpec((1, c_blk, r * r, h_blk, W),
                             lambda b, c, h: (b, c, 0, h, 0)),
                pl.BlockSpec((r * r, W, N), lambda b, c, h: (0, 0, 0)),
            ],
            out_specs=pl.BlockSpec((1, c_blk, h_blk, N),
                                   lambda b, c, h: (b, c, h, 0)),
        ),
        compiler_params=pltpu.CompilerParams(
            dimension_semantics=("parallel", "parallel", "parallel"),
            vmem_limit_bytes=int(vmem_limit),
        ),
        cost_estimate=pl.CostEstimate(
            flops=flops, transcendentals=0, bytes_accessed=io_bytes),
    )


def pixel_shuffle(x, upscale_factor):
    """2-D PixelShuffle, NCHW: (B, C*r^2, H, W) -> (B, C, H*r, W*r)."""
    B, C_in, H, W = x.shape
    r = int(upscale_factor)
    if C_in % (r * r) != 0:
        raise ValueError("channels must be divisible by upscale_factor**2")
    # TODO(synk): integer dtypes would need a matmul-free lane shuffle (v7x MXU
    # has no integer path); float dtypes only here.
    if not jnp.issubdtype(x.dtype, jnp.floating):
        raise NotImplementedError("float dtypes only")
    C_out = C_in // (r * r)
    if r == 1:
        return x

    budget, vmem_limit = _vmem_params()
    itemsize = jnp.dtype(x.dtype).itemsize
    c_blk, h_blk = _choose_blocks(B, C_out, H, W, r, itemsize, budget)

    pc = _make_perm(W, r, x.dtype)                     # (r*r, W, r*r*W)
    x5 = x.reshape(B, C_out, r * r, H, W)              # free contiguous view

    fn = _build_pixel_shuffle(B, C_out, H, W, r, jnp.dtype(x.dtype), c_blk,
                              h_blk, vmem_limit)
    out_dense = fn(x5, pc)                             # (B, C_out, H, r*r*W)
    # (h, i*W*r + w*r + j) flattens to (h*r + i, w*r + j): free reshape.
    return out_dense.reshape(B, C_out, H * r, W * r)


def pixel_shuffle_ref(x, r):
    B, C_in, H, W = x.shape
    C_out = C_in // (r * r)
    v = x.reshape(B, C_out, r, r, H, W)
    v = jnp.transpose(v, (0, 1, 4, 2, 5, 3))
    return v.reshape(B, C_out, H * r, W * r)


if __name__ == "__main__":
    key = jax.random.PRNGKey(0)
    cases = [
        # (B, C_in, H, W, r) -- first case matches the PyTorch module's setup
        (2, 4, 16, 16, 2),
        (2, 16, 16, 16, 2),    # C_out = 4
        (1, 18, 8, 24, 3),     # r = 3, non-square spatial dims
        (1, 256, 8, 16, 2),    # C_out = 64: exercises fused multi-channel path
    ]
    for (B, C_in, H, W, r) in cases:
        key, sub = jax.random.split(key)
        x = jax.random.normal(sub, (B, C_in, H, W), dtype=jnp.float32)
        out = jax.block_until_ready(pixel_shuffle(x, r))
        ref = pixel_shuffle_ref(x, r)
        assert out.shape == ref.shape, (out.shape, ref.shape)
        assert jnp.allclose(out, ref), f"PixelShuffle mismatch for {(B, C_in, H, W, r)}"
    print("KERNEL_OK")
</pallas_src>

<mosaic_0001>
module attributes {stable_mosaic.version = 11 : i64} {
  func.func @_pixel_shuffle_kernel(%arg0: i32, %arg1: i32, %arg2: i32, %arg3: memref<1x1x4x8x16xf32, #tpu.memory_space<vmem>>, %arg4: memref<4x16x64xf32, #tpu.memory_space<vmem>>, %arg5: memref<1x1x8x64xf32, #tpu.memory_space<vmem>>) attributes {dimension_semantics = [#tpu.dimension_semantics<parallel>, #tpu.dimension_semantics<parallel>, #tpu.dimension_semantics<parallel>], iteration_bounds = array<i64: 2, 1, 2>, scalar_prefetch = 0 : i64, scratch_operands = 0 : i64, tpu.core_type = #tpu.core_type<tc>, window_params = [{transform_indices = @transform_0, window_bounds = array<i64: 1, 1, 4, 8, 16>}, {pipeline_mode = #tpu.pipeline_mode<synchronous>, transform_indices = @transform_1, window_bounds = array<i64: 4, 16, 64>}, {transform_indices = @transform_2, window_bounds = array<i64: 1, 1, 8, 64>}]} {
    %cst = arith.constant 0.000000e+00 : f32
    %0 = vector.broadcast %cst : f32 to vector<8x64xf32>
    %c0 = arith.constant 0 : index
    %c0_0 = arith.constant 0 : index
    %c0_1 = arith.constant 0 : index
    %c0_2 = arith.constant 0 : index
    %c0_3 = arith.constant 0 : index
    %1 = vector.load %arg3[%c0, %c0_0, %c0_1, %c0_2, %c0_3] : memref<1x1x4x8x16xf32, #tpu.memory_space<vmem>>, vector<1x1x1x8x16xf32>
    %2 = vector.shape_cast %1 : vector<1x1x1x8x16xf32> to vector<8x16xf32>
    %c0_4 = arith.constant 0 : index
    %c0_5 = arith.constant 0 : index
    %c0_6 = arith.constant 0 : index
    %3 = vector.load %arg4[%c0_4, %c0_5, %c0_6] : memref<4x16x64xf32, #tpu.memory_space<vmem>>, vector<1x16x64xf32>
    %4 = vector.shape_cast %3 : vector<1x16x64xf32> to vector<16x64xf32>
    %cst_7 = arith.constant dense<0.000000e+00> : vector<8x64xf32>
    %5 = tpu.matmul %2, %4, %cst_7 {dimension_numbers = #tpu.dot_dimension_numbers<[1], [0], [0], [1], [0, 0, 1, 1], [], []>, precision = #tpu.contract_precision<fp32>} : vector<8x16xf32>, vector<16x64xf32>, vector<8x64xf32> -> vector<8x64xf32>
    %6 = arith.addf %0, %5 : vector<8x64xf32>
    %c0_8 = arith.constant 0 : index
    %c0_9 = arith.constant 0 : index
    %c1 = arith.constant 1 : index
    %c0_10 = arith.constant 0 : index
    %c0_11 = arith.constant 0 : index
    %7 = vector.load %arg3[%c0_8, %c0_9, %c1, %c0_10, %c0_11] : memref<1x1x4x8x16xf32, #tpu.memory_space<vmem>>, vector<1x1x1x8x16xf32>
    %8 = vector.shape_cast %7 : vector<1x1x1x8x16xf32> to vector<8x16xf32>
    %c1_12 = arith.constant 1 : index
    %c0_13 = arith.constant 0 : index
    %c0_14 = arith.constant 0 : index
    %9 = vector.load %arg4[%c1_12, %c0_13, %c0_14] : memref<4x16x64xf32, #tpu.memory_space<vmem>>, vector<1x16x64xf32>
    %10 = vector.shape_cast %9 : vector<1x16x64xf32> to vector<16x64xf32>
    %cst_15 = arith.constant dense<0.000000e+00> : vector<8x64xf32>
    %11 = tpu.matmul %8, %10, %cst_15 {dimension_numbers = #tpu.dot_dimension_numbers<[1], [0], [0], [1], [0, 0, 1, 1], [], []>, precision = #tpu.contract_precision<fp32>} : vector<8x16xf32>, vector<16x64xf32>, vector<8x64xf32> -> vector<8x64xf32>
    %12 = arith.addf %6, %11 : vector<8x64xf32>
    %c0_16 = arith.constant 0 : index
    %c0_17 = arith.constant 0 : index
    %c2 = arith.constant 2 : index
    %c0_18 = arith.constant 0 : index
    %c0_19 = arith.constant 0 : index
    %13 = vector.load %arg3[%c0_16, %c0_17, %c2, %c0_18, %c0_19] : memref<1x1x4x8x16xf32, #tpu.memory_space<vmem>>, vector<1x1x1x8x16xf32>
    %14 = vector.shape_cast %13 : vector<1x1x1x8x16xf32> to vector<8x16xf32>
    %c2_20 = arith.constant 2 : index
    %c0_21 = arith.constant 0 : index
    %c0_22 = arith.constant 0 : index
    %15 = vector.load %arg4[%c2_20, %c0_21, %c0_22] : memref<4x16x64xf32, #tpu.memory_space<vmem>>, vector<1x16x64xf32>
    %16 = vector.shape_cast %15 : vector<1x16x64xf32> to vector<16x64xf32>
    %cst_23 = arith.constant dense<0.000000e+00> : vector<8x64xf32>
    %17 = tpu.matmul %14, %16, %cst_23 {dimension_numbers = #tpu.dot_dimension_numbers<[1], [0], [0], [1], [0, 0, 1, 1], [], []>, precision = #tpu.contract_precision<fp32>} : vector<8x16xf32>, vector<16x64xf32>, vector<8x64xf32> -> vector<8x64xf32>
    %18 = arith.addf %12, %17 : vector<8x64xf32>
    %c0_24 = arith.constant 0 : index
    %c0_25 = arith.constant 0 : index
    %c3 = arith.constant 3 : index
    %c0_26 = arith.constant 0 : index
    %c0_27 = arith.constant 0 : index
    %19 = vector.load %arg3[%c0_24, %c0_25, %c3, %c0_26, %c0_27] : memref<1x1x4x8x16xf32, #tpu.memory_space<vmem>>, vector<1x1x1x8x16xf32>
    %20 = vector.shape_cast %19 : vector<1x1x1x8x16xf32> to vector<8x16xf32>
    %c3_28 = arith.constant 3 : index
    %c0_29 = arith.constant 0 : index
    %c0_30 = arith.constant 0 : index
    %21 = vector.load %arg4[%c3_28, %c0_29, %c0_30] : memref<4x16x64xf32, #tpu.memory_space<vmem>>, vector<1x16x64xf32>
    %22 = vector.shape_cast %21 : vector<1x16x64xf32> to vector<16x64xf32>
    %cst_31 = arith.constant dense<0.000000e+00> : vector<8x64xf32>
    %23 = tpu.matmul %20, %22, %cst_31 {dimension_numbers = #tpu.dot_dimension_numbers<[1], [0], [0], [1], [0, 0, 1, 1], [], []>, precision = #tpu.contract_precision<fp32>} : vector<8x16xf32>, vector<16x64xf32>, vector<8x64xf32> -> vector<8x64xf32>
    %24 = arith.addf %18, %23 : vector<8x64xf32>
    %25 = vector.shape_cast %24 : vector<8x64xf32> to vector<1x1x8x64xf32>
    %c0_32 = arith.constant 0 : index
    %c0_33 = arith.constant 0 : index
    %c0_34 = arith.constant 0 : index
    %c0_35 = arith.constant 0 : index
    %26 = vector.load %arg5[%c0_32, %c0_33, %c0_34, %c0_35] : memref<1x1x8x64xf32, #tpu.memory_space<vmem>>, vector<1x1x8x64xf32>
    tpu.vector_store %arg5[%c0_32, %c0_33, %c0_34, %c0_35], %25 {strides = array<i32>} : memref<1x1x8x64xf32, #tpu.memory_space<vmem>>, vector<1x1x8x64xf32>,
    return
  }
  func.func @transform_0(%arg0: i32, %arg1: i32, %arg2: i32) -> (i32, i32, i32, i32, i32) {
    %c0_i32 = arith.constant 0 : i32
    %c0_i32_0 = arith.constant 0 : i32
    %c0_i32_1 = arith.constant 0 : i32
    return %arg0, %arg1, %c0_i32, %arg2, %c0_i32_0 : i32, i32, i32, i32, i32
  }
  func.func @transform_1(%arg0: i32, %arg1: i32, %arg2: i32) -> (i32, i32, i32) {
    %c0_i32 = arith.constant 0 : i32
    %c0_i32_0 = arith.constant 0 : i32
    %c0_i32_1 = arith.constant 0 : i32
    %c0_i32_2 = arith.constant 0 : i32
    return %c0_i32, %c0_i32_0, %c0_i32_1 : i32, i32, i32
  }
  func.func @transform_2(%arg0: i32, %arg1: i32, %arg2: i32) -> (i32, i32, i32, i32) {
    %c0_i32 = arith.constant 0 : i32
    %c0_i32_0 = arith.constant 0 : i32
    return %arg0, %arg1, %arg2, %c0_i32 : i32, i32, i32, i32
  }
}

</mosaic_0001>

<llo_original>
// kernel: tpu_custom_call.1
$region0: #{tpu_custom_call.1}
  #allocation0 [shape = 'u32[]', space=smem, size = 0x4, offset = 0x4, fixed_abs, tag = 'smem constant byte address 0x4 - core index']
  #allocation1 [shape = 'u32[72,128]{1,0:T(1,128)}', space=vmem, size = 0x9000, scoped, tag = 'internal scratch']
  %s0 = inlined_call_operand.hbm [shape: f32[2,1,4,16,16], index: 0, kind: input, shape index: {}]
  %s1 = inlined_call_operand.hbm [shape: f32[4,16,64], index: 1, kind: input, shape index: {}]
  %s2 = inlined_call_operand.hbm [shape: f32[2,1,16,64], index: 2, kind: output, shape index: {}]
  %s3 = sld [smem:[#allocation0]]
  $region49: #{tpu_custom_call.1} parent=0
    _
  %s5 = ssub.s32 1, %s3
  %s6 = scalar_select 0, %s5, %s3
  $region1: #{tpu_custom_call.1} parent=0
    #allocation2 [shape = 'u8[32768]{0}', space=vmem, size = 0x8000, scoped, tag = 'input window, operand 0']
    #allocation3 [shape = 's32[2]{0}', space=sflag, size = 0x8, scoped, tag = 'scoped memory for tpu_custom_call.1']
    #allocation4 [shape = 's32[2]{0}', space=sflag, size = 0x8, scoped, tag = 'scoped memory for tpu_custom_call.1']
    #allocation5 [shape = 'u8[32768]{0}', space=vmem, size = 0x8000, scoped, tag = 'input window, operand 1, single buffered']
    #allocation6 [shape = 's32[1]{0}', space=sflag, size = 0x4, scoped, tag = 'scoped memory for tpu_custom_call.1']
    #allocation7 [shape = 'u8[8192]{0}', space=vmem, size = 0x2000, scoped, tag = 'output window, operand 0']
    %7 = vsyncpa [#allocation3], 0
    %s8 = scalar_lea.sflag [#allocation3], 1
    %9 = vsyncpa %s8, 0
    %10 = vsyncpa [#allocation6], 0
    %11 = vsyncpa [#allocation4], 0
    %s12 = scalar_lea.sflag [#allocation4], 1
    %13 = vsyncpa %s12, 0
    loop: start=0, step=1, limit=6
    $region2: #{tpu_custom_call.1} parent=1 // loop_pre_header
      _
    $region3: #{tpu_custom_call.1} parent=1 // loop_header
      %s15 = sphi 0, %s19
      %p16 = scmp.ge.s32.totalorder %s15, 6
      %s22 = sphi 0, %s41
      %s23 = sphi 0, %s37
      %s24 = sphi 0, %s33
      %s25 = sphi 0, %s22
      %s26 = sphi 0, %s23
      %s27 = sphi 0, %s24
      %s28 = sphi 0, %s25
      %s29 = sphi 0, %s26
      %s30 = sphi 0, %s27
      %s48 = sphi 0, %s50
      %s51 = sphi 0, %s48
      %s52 = sphi 0, %s51
      %s68 = sphi 0, %s52
      %s72 = sphi 0, %s72
      %s74 = sphi 0, %s72
      %s75 = sphi 0, %s74
      %s89 = sphi 0, %s75
      %s99 = sphi 0, %s101
      %s102 = sphi 0, %s99
      %s103 = sphi 0, %s102
      %s119 = sphi 0, %s103
    $region4: #{tpu_custom_call.1} parent=1 // loop_header_branch
      %18 = sbr.rel (%p16) target = $region8
    $region5: #{tpu_custom_call.1} parent=1 // loop_body
      %s20 = ssub.s32 %s15, 1
      %s21 = ssub.s32 %s15, 2
      %s31 = sadd.s32 1, %s24
      %p32 = scmp.ge.s32.totalorder %s31, 2
      %s33 = scalar_select %p32, 0, %s31
      %s34 = sadd.s32 1, %s23
      %s35 = scalar_select %p32, %s34, %s23
      %p36 = scmp.ge.s32.totalorder %s35, 1
      %s37 = scalar_select %p36, 0, %s35
      %s38 = sadd.s32 1, %s22
      %s39 = scalar_select %p36, %s38, %s22
      %p40 = scmp.ge.s32.totalorder %s39, 2
      %s41 = scalar_select %p40, 0, %s39
      %s42 = ssub.s32 %s22, %s41
      %s43 = ssub.s32 %s23, %s37
      %s44 = sor.u32 %s42, %s43
      %s45 = ssub.s32 %s24, %s33
      %s46 = sor.u32 %s44, %s45
      %p47 = scmp.eq.s32.totalorder %s46, 0
      %s49 = sadd.s32 %s48, 1
      %s50 = scalar_select %p47, %s48, %s49
      %p53 = pneg %p47
      %p54 = scmp.eq.s32.totalorder %s15, 3
      %p55 = por %p53, %p54
      %p56 = scmp.ne.s32.totalorder %s48, %s51
      %p57 = scmp.eq.s32.totalorder %s15, 0
      %p58 = por %p56, %p57
      %p59 = scmp.ne.s32.totalorder %s48, %s51
      %p60 = scmp.eq.s32.totalorder %s20, 3
      %p61 = por %p59, %p60
      %p62 = scmp.ne.s32.totalorder %s51, %s52
      %p63 = scmp.eq.s32.totalorder %s20, 0
      %p64 = por %p62, %p63
      %p65 = scmp.ne.s32.totalorder %s51, %s52
      %p66 = scmp.eq.s32.totalorder %s21, 3
      %p67 = por %p65, %p66
      %p69 = scmp.ne.s32.totalorder %s52, %s68
      %p70 = scmp.eq.s32.totalorder %s21, 0
      %p71 = por %p69, %p70
      %s73 = sadd.s32 %s72, 1
      %p76 = scmp.eq.s32.totalorder %s15, 3
      %p77 = scmp.ne.s32.totalorder %s72, %s74
      %p78 = scmp.eq.s32.totalorder %s15, 0
      %p79 = por %p77, %p78
      %p80 = scmp.ne.s32.totalorder %s72, %s74
      %p81 = scmp.eq.s32.totalorder %s20, 3
      %p82 = por %p80, %p81
      %p83 = scmp.ne.s32.totalorder %s74, %s75
      %p84 = scmp.eq.s32.totalorder %s20, 0
      %p85 = por %p83, %p84
      %p86 = scmp.ne.s32.totalorder %s74, %s75
      %p87 = scmp.eq.s32.totalorder %s21, 3
      %p88 = por %p86, %p87
      %p90 = scmp.ne.s32.totalorder %s75, %s89
      %p91 = scmp.eq.s32.totalorder %s21, 0
      %p92 = por %p90, %p91
      %s93 = ssub.s32 %s22, %s41
      %s94 = ssub.s32 %s23, %s37
      %s95 = sor.u32 %s93, %s94
      %s96 = ssub.s32 %s24, %s33
      %s97 = sor.u32 %s95, %s96
      %p98 = scmp.eq.s32.totalorder %s97, 0
      %s100 = sadd.s32 %s99, 1
      %s101 = scalar_select %p98, %s99, %s100
      %p104 = pneg %p98
      %p105 = scmp.eq.s32.totalorder %s15, 3
      %p106 = por %p104, %p105
      %p107 = scmp.ne.s32.totalorder %s99, %s102
      %p108 = scmp.eq.s32.totalorder %s15, 0
      %p109 = por %p107, %p108
      %p110 = scmp.ne.s32.totalorder %s99, %s102
      %p111 = scmp.eq.s32.totalorder %s20, 3
      %p112 = por %p110, %p111
      %p113 = scmp.ne.s32.totalorder %s102, %s103
      %p114 = scmp.eq.s32.totalorder %s20, 0
      %p115 = por %p113, %p114
      %p116 = scmp.ne.s32.totalorder %s102, %s103
      %p117 = scmp.eq.s32.totalorder %s21, 3
      %p118 = por %p116, %p117
      %p120 = scmp.ne.s32.totalorder %s103, %s119
      %p121 = scmp.eq.s32.totalorder %s21, 0
      %p122 = por %p120, %p121
      %p123 = scmp.le.s32.totalorder 1, %s15
      %p124 = scmp.lt.s32.totalorder %s15, 5
      %p125 = pnand %p123, %p124
      %p126 = pneg %p125
      // Predicated region
      $region9: #{tpu_custom_call.1} parent=5 // pred_check
        _
      $region10: #{tpu_custom_call.1} parent=5 // pred_check_branch
        %128 = sbr.rel (%p125) target = $region12
      $region11: #{tpu_custom_call.1} parent=5 // pred_region
        %s129 = ssub.s32 %s15, 1
        // Predicated region
        $region13: #{tpu_custom_call.1} parent=11 // pred_check
          %p130 = pneg %p85
        $region14: #{tpu_custom_call.1} parent=11 // pred_check_branch
          %132 = sbr.rel (%p130) target = $region16
        $region15: #{tpu_custom_call.1} parent=11 // pred_region
          %134 = vsyncadd [#allocation6], 0
          %s135 = sshll.u32 %s1, 4
          %s136 = int_to_ptr.hbm [resolvable:$true] %s135
          %s137 = sshll.u32 [#allocation5], 4
          %s138 = int_to_ptr.vmem [resolvable:$true] %s137
          %143 = dma.hbm_to_vmem [thread:$0]  %s136, 1024, %s138, [#allocation6], 128, 128, 8
        $region16: #{tpu_custom_call.1} parent=11 // pred_fallthru
          _
      $region12: #{tpu_custom_call.1} parent=5 // pred_fallthru
        _
      %p144 = scmp.lt.s32.totalorder %s15, 4
      // Predicated region
      $region17: #{tpu_custom_call.1} parent=5 // pred_check
        %p145 = pneg %p144
      $region18: #{tpu_custom_call.1} parent=5 // pred_check_branch
        %147 = sbr.rel (%p145) target = $region20
      $region19: #{tpu_custom_call.1} parent=5 // pred_region
        // Predicated region
        $region21: #{tpu_custom_call.1} parent=19 // pred_check
          %p148 = pneg %p58
        $region22: #{tpu_custom_call.1} parent=19 // pred_check_branch
          %150 = sbr.rel (%p148) target = $region24
        $region23: #{tpu_custom_call.1} parent=19 // pred_region
          %s151 = sand.u32 %s48, 1
          %s152 = scalar_lea.sflag [#allocation3], %s151
          %s153 = sand.u32 %s48, 1
          %s154 = smul.addr %s153, 32
          %s155 = scalar_lea.vmem [#allocation2], %s154
          %157 = vsyncadd %s152, 0
          %s158 = smul.addr %s23, 8
          %s159 = sadd.s32 %s24, %s158
          %s160 = smul.addr %s22, 8
          %s161 = sadd.s32 %s159, %s160
          %s162 = smul.addr %s161, 8
          %s163 = scalar_lea.hbm %s0, %s162
          %s164 = sshll.u32 %s163, 4
          %s165 = int_to_ptr.hbm [resolvable:$true] %s164
          %s166 = sshll.u32 %s155, 4
          %s167 = int_to_ptr.vmem [resolvable:$true] %s166
          %172 = dma.hbm_to_vmem [thread:$0]  %s165, 512, %s167, %s152, 256, 128, 8
        $region24: #{tpu_custom_call.1} parent=19 // pred_fallthru
          _
      $region20: #{tpu_custom_call.1} parent=5 // pred_fallthru
        _
      %p173 = scmp.le.s32.totalorder 1, %s15
      %p174 = scmp.lt.s32.totalorder %s15, 5
      %p175 = pnand %p173, %p174
      %p176 = pneg %p175
      // Predicated region
      $region25: #{tpu_custom_call.1} parent=5 // pred_check
        _
      $region26: #{tpu_custom_call.1} parent=5 // pred_check_branch
        %178 = sbr.rel (%p175) target = $region28
      $region27: #{tpu_custom_call.1} parent=5 // pred_region
        %s179 = ssub.s32 %s15, 1
        %s180 = sand.u32 %s51, 1
        %s181 = scalar_lea.sflag [#allocation3], %s180
        %s182 = sand.u32 %s51, 1
        %s183 = smul.addr %s182, 32
        %s184 = scalar_lea.vmem [#allocation2], %s183
        // Predicated region
        $region29: #{tpu_custom_call.1} parent=27 // pred_check
          %p185 = pneg %p64
        $region30: #{tpu_custom_call.1} parent=27 // pred_check_branch
          %187 = sbr.rel (%p185) target = $region32
        $region31: #{tpu_custom_call.1} parent=27 // pred_region
          %189 = dma.done %s181, 512
        $region32: #{tpu_custom_call.1} parent=27 // pred_fallthru
          _
        // Predicated region
        $region33: #{tpu_custom_call.1} parent=27 // pred_check
          %p190 = pneg %p85
        $region34: #{tpu_custom_call.1} parent=27 // pred_check_branch
          %192 = sbr.rel (%p190) target = $region36
        $region35: #{tpu_custom_call.1} parent=27 // pred_region
          %194 = dma.done [#allocation6], 1024
        $region36: #{tpu_custom_call.1} parent=27 // pred_fallthru
          _
        %s195 = sand.u32 %s51, 1
        %s196 = scalar_lea.sflag [#allocation3], %s195
        %s197 = sand.u32 %s51, 1
        %s198 = smul.addr %s197, 32
        %s199 = scalar_lea.vmem [#allocation2], %s198
        %p200 = pneg %p64
        %p201 = pneg %p61
        %p202 = pneg %p85
        %p203 = pneg %p82
        %p204 = pneg %p115
        %p205 = pneg %p112
        %s206 = sand.u32 %s102, 1
        %s207 = scalar_lea.sflag [#allocation4], %s206
        %s208 = sand.u32 %s102, 1
        %s209 = smul.addr %s208, 8
        %s210 = scalar_lea.vmem [#allocation7], %s209
        %v211 = vld [vmem:[%s184] sm:$0xff]
        %v212 = vld [vmem:[#allocation5] sm:$0xff]
        %v213 = vld [vmem:[#allocation5 + $0x8] sm:$0xff]
        %s214 = scalar_lea.vmem %s184, 8 [#allocation2]
        %v215 = vld [vmem:[%s214] sm:$0xff]
        %s216 = scalar_lea.vmem [#allocation5], 16
        %v217 = vld [vmem:[%s216] sm:$0xff]
        %v218 = vld [vmem:[%s216 + $0x8] sm:$0xff]
        %vm219 = vcmask 130048
        %v221 = vsel %vm219, %v215, 0
        %223 = vmatpush.msra.mxu0 0.0
        %224 = vmatpush.msra.mxu0 0.0
        %225 = vmatpush.msra.mxu0 0.0
        %226 = vmatpush.msra.mxu0 0.0
        %227 = vmatpush.msra.mxu0 0.0
        %228 = vmatpush.msra.mxu0 0.0
        %229 = vmatpush.msra.mxu0 0.0
        %230 = vmatpush.msra.mxu0 0.0
        %231 = vmatpush.msra.mxu0 0.0
        %232 = vmatpush.msra.mxu0 0.0
        %233 = vmatpush.msra.mxu0 0.0
        %234 = vmatpush.msra.mxu0 0.0
        %235 = vmatpush.msra.mxu0 0.0
        %236 = vmatpush.msra.mxu0 0.0
        %v237 = vand.u32 %v218, 4294901760
        %238 = vmatpush.msra.mxu0 %v237
        %v239 = vand.u32 %v217, 4294901760
        %240 = vmatpush.msra.mxu0 %v239
        %v241 = vand.u32 %v221, 4294901760
        %v242 = vsub.f32 %v221, %v241
        %v243 = vand.u32 %v242, 4294901760
        %v244 = vsub.f32 %v242, %v243
        %v245 = vand.u32 %v244, 4294901760
        %246 = vmatmul.f32.gmra.mxu0 %v245
        %v247 = vpop.f32.mrf.mxu0
        %v248 = vadd.f32 0.0, %v247
        %249 = vdwg.mxu0
        %250 = vmatpush.msra.mxu0 0.0
        %251 = vmatpush.msra.mxu0 0.0
        %252 = vmatpush.msra.mxu0 0.0
        %253 = vmatpush.msra.mxu0 0.0
        %254 = vmatpush.msra.mxu0 0.0
        %255 = vmatpush.msra.mxu0 0.0
        %256 = vmatpush.msra.mxu0 0.0
        %257 = vmatpush.msra.mxu0 0.0
        %258 = vmatpush.msra.mxu0 0.0
        %259 = vmatpush.msra.mxu0 0.0
        %260 = vmatpush.msra.mxu0 0.0
        %261 = vmatpush.msra.mxu0 0.0
        %262 = vmatpush.msra.mxu0 0.0
        %263 = vmatpush.msra.mxu0 0.0
        %v264 = vand.u32 %v218, 4294901760
        %v265 = vsub.f32 %v218, %v264
        %v266 = vand.u32 %v265, 4294901760
        %v267 = vsub.f32 %v265, %v266
        %v268 = vand.u32 %v267, 4294901760
        %269 = vmatpush.msra.mxu0 %v268
        %v270 = vand.u32 %v217, 4294901760
        %v271 = vsub.f32 %v217, %v270
        %v272 = vand.u32 %v271, 4294901760
        %v273 = vsub.f32 %v271, %v272
        %v274 = vand.u32 %v273, 4294901760
        %275 = vmatpush.msra.mxu0 %v274
        %v276 = vand.u32 %v221, 4294901760
        %277 = vmatmul.f32.gmra.mxu0 %v276
        %v278 = vpop.f32.mrf.mxu0
        %v279 = vadd.f32 %v248, %v278
        %280 = vdwg.mxu0
        %281 = vmatpush.msra.mxu0 0.0
        %282 = vmatpush.msra.mxu0 0.0
        %283 = vmatpush.msra.mxu0 0.0
        %284 = vmatpush.msra.mxu0 0.0
        %285 = vmatpush.msra.mxu0 0.0
        %286 = vmatpush.msra.mxu0 0.0
        %287 = vmatpush.msra.mxu0 0.0
        %288 = vmatpush.msra.mxu0 0.0
        %289 = vmatpush.msra.mxu0 0.0
        %290 = vmatpush.msra.mxu0 0.0
        %291 = vmatpush.msra.mxu0 0.0
        %292 = vmatpush.msra.mxu0 0.0
        %293 = vmatpush.msra.mxu0 0.0
        %294 = vmatpush.msra.mxu0 0.0
        %v295 = vand.u32 %v218, 4294901760
        %v296 = vsub.f32 %v218, %v295
        %297 = vmatpush.msra.mxu0 %v296
        %v298 = vand.u32 %v217, 4294901760
        %v299 = vsub.f32 %v217, %v298
        %300 = vmatpush.msra.mxu0 %v299
        %v301 = vand.u32 %v221, 4294901760
        %v302 = vsub.f32 %v221, %v301
        %303 = vmatmul.f32.gmra.mxu0 %v302
        %v304 = vpop.f32.mrf.mxu0
        %v305 = vadd.f32 %v279, %v304
        %306 = vdwg.mxu0
        %307 = vmatpush.msra.mxu0 0.0
        %308 = vmatpush.msra.mxu0 0.0
        %309 = vmatpush.msra.mxu0 0.0
        %310 = vmatpush.msra.mxu0 0.0
        %311 = vmatpush.msra.mxu0 0.0
        %312 = vmatpush.msra.mxu0 0.0
        %313 = vmatpush.msra.mxu0 0.0
        %314 = vmatpush.msra.mxu0 0.0
        %315 = vmatpush.msra.mxu0 0.0
        %316 = vmatpush.msra.mxu0 0.0
        %317 = vmatpush.msra.mxu0 0.0
        %318 = vmatpush.msra.mxu0 0.0
        %319 = vmatpush.msra.mxu0 0.0
        %320 = vmatpush.msra.mxu0 0.0
        %v321 = vand.u32 %v218, 4294901760
        %322 = vmatpush.msra.mxu0 %v321
        %v323 = vand.u32 %v217, 4294901760
        %324 = vmatpush.msra.mxu0 %v323
        %v325 = vand.u32 %v221, 4294901760
        %v326 = vsub.f32 %v221, %v325
        %v327 = vand.u32 %v326, 4294901760
        %328 = vmatmul.f32.gmra.mxu0 %v327
        %v329 = vpop.f32.mrf.mxu0
        %v330 = vadd.f32 %v305, %v329
        %331 = vdwg.mxu0
        %332 = vmatpush.msra.mxu0 0.0
        %333 = vmatpush.msra.mxu0 0.0
        %334 = vmatpush.msra.mxu0 0.0
        %335 = vmatpush.msra.mxu0 0.0
        %336 = vmatpush.msra.mxu0 0.0
        %337 = vmatpush.msra.mxu0 0.0
        %338 = vmatpush.msra.mxu0 0.0
        %339 = vmatpush.msra.mxu0 0.0
        %340 = vmatpush.msra.mxu0 0.0
        %341 = vmatpush.msra.mxu0 0.0
        %342 = vmatpush.msra.mxu0 0.0
        %343 = vmatpush.msra.mxu0 0.0
        %344 = vmatpush.msra.mxu0 0.0
        %345 = vmatpush.msra.mxu0 0.0
        %v346 = vand.u32 %v218, 4294901760
        %v347 = vsub.f32 %v218, %v346
        %v348 = vand.u32 %v347, 4294901760
        %349 = vmatpush.msra.mxu0 %v348
        %v350 = vand.u32 %v217, 4294901760
        %v351 = vsub.f32 %v217, %v350
        %v352 = vand.u32 %v351, 4294901760
        %353 = vmatpush.msra.mxu0 %v352
        %v354 = vand.u32 %v221, 4294901760
        %355 = vmatmul.f32.gmra.mxu0 %v354
        %v356 = vpop.f32.mrf.mxu0
        %v357 = vadd.f32 %v330, %v356
        %358 = vdwg.mxu0
        %359 = vmatpush.msra.mxu0 0.0
        %360 = vmatpush.msra.mxu0 0.0
        %361 = vmatpush.msra.mxu0 0.0
        %362 = vmatpush.msra.mxu0 0.0
        %363 = vmatpush.msra.mxu0 0.0
        %364 = vmatpush.msra.mxu0 0.0
        %365 = vmatpush.msra.mxu0 0.0
        %366 = vmatpush.msra.mxu0 0.0
        %367 = vmatpush.msra.mxu0 0.0
        %368 = vmatpush.msra.mxu0 0.0
        %369 = vmatpush.msra.mxu0 0.0
        %370 = vmatpush.msra.mxu0 0.0
        %371 = vmatpush.msra.mxu0 0.0
        %372 = vmatpush.msra.mxu0 0.0
        %v373 = vand.u32 %v218, 4294901760
        %374 = vmatpush.msra.mxu0 %v373
        %v375 = vand.u32 %v217, 4294901760
        %376 = vmatpush.msra.mxu0 %v375
        %v377 = vand.u32 %v221, 4294901760
        %378 = vmatmul.f32.gmra.mxu0 %v377
        %v379 = vpop.f32.mrf.mxu0
        %v380 = vadd.f32 %v357, %v379
        %381 = vdwg.mxu0
        %v383 = vsel %vm219, %v211, 0
        %385 = vmatpush.msra.mxu0 0.0
        %386 = vmatpush.msra.mxu0 0.0
        %387 = vmatpush.msra.mxu0 0.0
        %388 = vmatpush.msra.mxu0 0.0
        %389 = vmatpush.msra.mxu0 0.0
        %390 = vmatpush.msra.mxu0 0.0
        %391 = vmatpush.msra.mxu0 0.0
        %392 = vmatpush.msra.mxu0 0.0
        %393 = vmatpush.msra.mxu0 0.0
        %394 = vmatpush.msra.mxu0 0.0
        %395 = vmatpush.msra.mxu0 0.0
        %396 = vmatpush.msra.mxu0 0.0
        %397 = vmatpush.msra.mxu0 0.0
        %398 = vmatpush.msra.mxu0 0.0
        %v399 = vand.u32 %v213, 4294901760
        %400 = vmatpush.msra.mxu0 %v399
        %v401 = vand.u32 %v212, 4294901760
        %402 = vmatpush.msra.mxu0 %v401
        %v403 = vand.u32 %v383, 4294901760
        %v404 = vsub.f32 %v383, %v403
        %v405 = vand.u32 %v404, 4294901760
        %v406 = vsub.f32 %v404, %v405
        %v407 = vand.u32 %v406, 4294901760
        %408 = vmatmul.f32.gmra.mxu0 %v407
        %v409 = vpop.f32.mrf.mxu0
        %v410 = vadd.f32 %v380, %v409
        %411 = vdwg.mxu0
        %412 = vmatpush.msra.mxu0 0.0
        %413 = vmatpush.msra.mxu0 0.0
        %414 = vmatpush.msra.mxu0 0.0
        %415 = vmatpush.msra.mxu0 0.0
        %416 = vmatpush.msra.mxu0 0.0
        %417 = vmatpush.msra.mxu0 0.0
        %418 = vmatpush.msra.mxu0 0.0
        %419 = vmatpush.msra.mxu0 0.0
        %420 = vmatpush.msra.mxu0 0.0
        %421 = vmatpush.msra.mxu0 0.0
        %422 = vmatpush.msra.mxu0 0.0
        %423 = vmatpush.msra.mxu0 0.0
        %424 = vmatpush.msra.mxu0 0.0
        %425 = vmatpush.msra.mxu0 0.0
        %v426 = vand.u32 %v213, 4294901760
        %v427 = vsub.f32 %v213, %v426
        %v428 = vand.u32 %v427, 4294901760
        %v429 = vsub.f32 %v427, %v428
        %v430 = vand.u32 %v429, 4294901760
        %431 = vmatpush.msra.mxu0 %v430
        %v432 = vand.u32 %v212, 4294901760
        %v433 = vsub.f32 %v212, %v432
        %v434 = vand.u32 %v433, 4294901760
        %v435 = vsub.f32 %v433, %v434
        %v436 = vand.u32 %v435, 4294901760
        %437 = vmatpush.msra.mxu0 %v436
        %v438 = vand.u32 %v383, 4294901760
        %439 = vmatmul.f32.gmra.mxu0 %v438
        %v440 = vpop.f32.mrf.mxu0
        %v441 = vadd.f32 %v410, %v440
        %442 = vdwg.mxu0
        %443 = vmatpush.msra.mxu0 0.0
        %444 = vmatpush.msra.mxu0 0.0
        %445 = vmatpush.msra.mxu0 0.0
        %446 = vmatpush.msra.mxu0 0.0
        %447 = vmatpush.msra.mxu0 0.0
        %448 = vmatpush.msra.mxu0 0.0
        %449 = vmatpush.msra.mxu0 0.0
        %450 = vmatpush.msra.mxu0 0.0
        %451 = vmatpush.msra.mxu0 0.0
        %452 = vmatpush.msra.mxu0 0.0
        %453 = vmatpush.msra.mxu0 0.0
        %454 = vmatpush.msra.mxu0 0.0
        %455 = vmatpush.msra.mxu0 0.0
        %456 = vmatpush.msra.mxu0 0.0
        %v457 = vand.u32 %v213, 4294901760
        %v458 = vsub.f32 %v213, %v457
        %459 = vmatpush.msra.mxu0 %v458
        %v460 = vand.u32 %v212, 4294901760
        %v461 = vsub.f32 %v212, %v460
        %462 = vmatpush.msra.mxu0 %v461
        %v463 = vand.u32 %v383, 4294901760
        %v464 = vsub.f32 %v383, %v463
        %465 = vmatmul.f32.gmra.mxu0 %v464
        %v466 = vpop.f32.mrf.mxu0
        %v467 = vadd.f32 %v441, %v466
        %468 = vdwg.mxu0
        %469 = vmatpush.msra.mxu0 0.0
        %470 = vmatpush.msra.mxu0 0.0
        %471 = vmatpush.msra.mxu0 0.0
        %472 = vmatpush.msra.mxu0 0.0
        %473 = vmatpush.msra.mxu0 0.0
        %474 = vmatpush.msra.mxu0 0.0
        %475 = vmatpush.msra.mxu0 0.0
        %476 = vmatpush.msra.mxu0 0.0
        %477 = vmatpush.msra.mxu0 0.0
        %478 = vmatpush.msra.mxu0 0.0
        %479 = vmatpush.msra.mxu0 0.0
        %480 = vmatpush.msra.mxu0 0.0
        %481 = vmatpush.msra.mxu0 0.0
        %482 = vmatpush.msra.mxu0 0.0
        %v483 = vand.u32 %v213, 4294901760
        %484 = vmatpush.msra.mxu0 %v483
        %v485 = vand.u32 %v212, 4294901760
        %486 = vmatpush.msra.mxu0 %v485
        %v487 = vand.u32 %v383, 4294901760
        %v488 = vsub.f32 %v383, %v487
        %v489 = vand.u32 %v488, 4294901760
        %490 = vmatmul.f32.gmra.mxu0 %v489
        %v491 = vpop.f32.mrf.mxu0
        %v492 = vadd.f32 %v467, %v491
        %493 = vdwg.mxu0
        %494 = vmatpush.msra.mxu0 0.0
        %495 = vmatpush.msra.mxu0 0.0
        %496 = vmatpush.msra.mxu0 0.0
        %497 = vmatpush.msra.mxu0 0.0
        %498 = vmatpush.msra.mxu0 0.0
        %499 = vmatpush.msra.mxu0 0.0
        %500 = vmatpush.msra.mxu0 0.0
        %501 = vmatpush.msra.mxu0 0.0
        %502 = vmatpush.msra.mxu0 0.0
        %503 = vmatpush.msra.mxu0 0.0
        %504 = vmatpush.msra.mxu0 0.0
        %505 = vmatpush.msra.mxu0 0.0
        %506 = vmatpush.msra.mxu0 0.0
        %507 = vmatpush.msra.mxu0 0.0
        %v508 = vand.u32 %v213, 4294901760
        %v509 = vsub.f32 %v213, %v508
        %v510 = vand.u32 %v509, 4294901760
        %511 = vmatpush.msra.mxu0 %v510
        %v512 = vand.u32 %v212, 4294901760
        %v513 = vsub.f32 %v212, %v512
        %v514 = vand.u32 %v513, 4294901760
        %515 = vmatpush.msra.mxu0 %v514
        %v516 = vand.u32 %v383, 4294901760
        %517 = vmatmul.f32.gmra.mxu0 %v516
        %v518 = vpop.f32.mrf.mxu0
        %v519 = vadd.f32 %v492, %v518
        %520 = vdwg.mxu0
        %521 = vmatpush.msra.mxu0 0.0
        %522 = vmatpush.msra.mxu0 0.0
        %523 = vmatpush.msra.mxu0 0.0
        %524 = vmatpush.msra.mxu0 0.0
        %525 = vmatpush.msra.mxu0 0.0
        %526 = vmatpush.msra.mxu0 0.0
        %527 = vmatpush.msra.mxu0 0.0
        %528 = vmatpush.msra.mxu0 0.0
        %529 = vmatpush.msra.mxu0 0.0
        %530 = vmatpush.msra.mxu0 0.0
        %531 = vmatpush.msra.mxu0 0.0
        %532 = vmatpush.msra.mxu0 0.0
        %533 = vmatpush.msra.mxu0 0.0
        %534 = vmatpush.msra.mxu0 0.0
        %v535 = vand.u32 %v213, 4294901760
        %536 = vmatpush.msra.mxu0 %v535
        %v537 = vand.u32 %v212, 4294901760
        %538 = vmatpush.msra.mxu0 %v537
        %v539 = vand.u32 %v383, 4294901760
        %540 = vmatmul.f32.gmra.mxu0 %v539
        %v541 = vpop.f32.mrf.mxu0
        %v542 = vadd.f32 %v519, %v541
        %543 = vdwg.mxu0
        %s544 = scalar_lea.vmem %s184, 16 [#allocation2]
        %v545 = vld [vmem:[%s544] sm:$0xff]
        %s546 = scalar_lea.vmem [#allocation5], 32
        %v547 = vld [vmem:[%s546] sm:$0xff]
        %v548 = vld [vmem:[%s546 + $0x8] sm:$0xff]
        %v550 = vsel %vm219, %v545, 0
        %552 = vmatpush.msra.mxu0 0.0
        %553 = vmatpush.msra.mxu0 0.0
        %554 = vmatpush.msra.mxu0 0.0
        %555 = vmatpush.msra.mxu0 0.0
        %556 = vmatpush.msra.mxu0 0.0
        %557 = vmatpush.msra.mxu0 0.0
        %558 = vmatpush.msra.mxu0 0.0
        %559 = vmatpush.msra.mxu0 0.0
        %560 = vmatpush.msra.mxu0 0.0
        %561 = vmatpush.msra.mxu0 0.0
        %562 = vmatpush.msra.mxu0 0.0
        %563 = vmatpush.msra.mxu0 0.0
        %564 = vmatpush.msra.mxu0 0.0
        %565 = vmatpush.msra.mxu0 0.0
        %v566 = vand.u32 %v548, 4294901760
        %567 = vmatpush.msra.mxu0 %v566
        %v568 = vand.u32 %v547, 4294901760
        %569 = vmatpush.msra.mxu0 %v568
        %v570 = vand.u32 %v550, 4294901760
        %v571 = vsub.f32 %v550, %v570
        %v572 = vand.u32 %v571, 4294901760
        %v573 = vsub.f32 %v571, %v572
        %v574 = vand.u32 %v573, 4294901760
        %575 = vmatmul.f32.gmra.mxu0 %v574
        %v576 = vpop.f32.mrf.mxu0
        %v577 = vadd.f32 0.0, %v576
        %578 = vdwg.mxu0
        %579 = vmatpush.msra.mxu0 0.0
        %580 = vmatpush.msra.mxu0 0.0
        %581 = vmatpush.msra.mxu0 0.0
        %582 = vmatpush.msra.mxu0 0.0
        %583 = vmatpush.msra.mxu0 0.0
        %584 = vmatpush.msra.mxu0 0.0
        %585 = vmatpush.msra.mxu0 0.0
        %586 = vmatpush.msra.mxu0 0.0
        %587 = vmatpush.msra.mxu0 0.0
        %588 = vmatpush.msra.mxu0 0.0
        %589 = vmatpush.msra.mxu0 0.0
        %590 = vmatpush.msra.mxu0 0.0
        %591 = vmatpush.msra.mxu0 0.0
        %592 = vmatpush.msra.mxu0 0.0
        %v593 = vand.u32 %v548, 4294901760
        %v594 = vsub.f32 %v548, %v593
        %v595 = vand.u32 %v594, 4294901760
        %v596 = vsub.f32 %v594, %v595
        %v597 = vand.u32 %v596, 4294901760
        %598 = vmatpush.msra.mxu0 %v597
        %v599 = vand.u32 %v547, 4294901760
        %v600 = vsub.f32 %v547, %v599
        %v601 = vand.u32 %v600, 4294901760
        %v602 = vsub.f32 %v600, %v601
        %v603 = vand.u32 %v602, 4294901760
        %604 = vmatpush.msra.mxu0 %v603
        %v605 = vand.u32 %v550, 4294901760
        %606 = vmatmul.f32.gmra.mxu0 %v605
        %v607 = vpop.f32.mrf.mxu0
        %v608 = vadd.f32 %v577, %v607
        %609 = vdwg.mxu0
        %610 = vmatpush.msra.mxu0 0.0
        %611 = vmatpush.msra.mxu0 0.0
        %612 = vmatpush.msra.mxu0 0.0
        %613 = vmatpush.msra.mxu0 0.0
        %614 = vmatpush.msra.mxu0 0.0
        %615 = vmatpush.msra.mxu0 0.0
        %616 = vmatpush.msra.mxu0 0.0
        %617 = vmatpush.msra.mxu0 0.0
        %618 = vmatpush.msra.mxu0 0.0
        %619 = vmatpush.msra.mxu0 0.0
        %620 = vmatpush.msra.mxu0 0.0
        %621 = vmatpush.msra.mxu0 0.0
        %622 = vmatpush.msra.mxu0 0.0
        %623 = vmatpush.msra.mxu0 0.0
        %v624 = vand.u32 %v548, 4294901760
        %v625 = vsub.f32 %v548, %v624
        %626 = vmatpush.msra.mxu0 %v625
        %v627 = vand.u32 %v547, 4294901760
        %v628 = vsub.f32 %v547, %v627
        %629 = vmatpush.msra.mxu0 %v628
        %v630 = vand.u32 %v550, 4294901760
        %v631 = vsub.f32 %v550, %v630
        %632 = vmatmul.f32.gmra.mxu0 %v631
        %v633 = vpop.f32.mrf.mxu0
        %v634 = vadd.f32 %v608, %v633
        %635 = vdwg.mxu0
        %636 = vmatpush.msra.mxu0 0.0
        %637 = vmatpush.msra.mxu0 0.0
        %638 = vmatpush.msra.mxu0 0.0
        %639 = vmatpush.msra.mxu0 0.0
        %640 = vmatpush.msra.mxu0 0.0
        %641 = vmatpush.msra.mxu0 0.0
        %642 = vmatpush.msra.mxu0 0.0
        %643 = vmatpush.msra.mxu0 0.0
        %644 = vmatpush.msra.mxu0 0.0
        %645 = vmatpush.msra.mxu0 0.0
        %646 = vmatpush.msra.mxu0 0.0
        %647 = vmatpush.msra.mxu0 0.0
        %648 = vmatpush.msra.mxu0 0.0
        %649 = vmatpush.msra.mxu0 0.0
        %v650 = vand.u32 %v548, 4294901760
        %651 = vmatpush.msra.mxu0 %v650
        %v652 = vand.u32 %v547, 4294901760
        %653 = vmatpush.msra.mxu0 %v652
        %v654 = vand.u32 %v550, 4294901760
        %v655 = vsub.f32 %v550, %v654
        %v656 = vand.u32 %v655, 4294901760
        %657 = vmatmul.f32.gmra.mxu0 %v656
        %v658 = vpop.f32.mrf.mxu0
        %v659 = vadd.f32 %v634, %v658
        %660 = vdwg.mxu0
        %661 = vmatpush.msra.mxu0 0.0
        %662 = vmatpush.msra.mxu0 0.0
        %663 = vmatpush.msra.mxu0 0.0
        %664 = vmatpush.msra.mxu0 0.0
        %665 = vmatpush.msra.mxu0 0.0
        %666 = vmatpush.msra.mxu0 0.0
        %667 = vmatpush.msra.mxu0 0.0
        %668 = vmatpush.msra.mxu0 0.0
        %669 = vmatpush.msra.mxu0 0.0
        %670 = vmatpush.msra.mxu0 0.0
        %671 = vmatpush.msra.mxu0 0.0
        %672 = vmatpush.msra.mxu0 0.0
        %673 = vmatpush.msra.mxu0 0.0
        %674 = vmatpush.msra.mxu0 0.0
        %v675 = vand.u32 %v548, 4294901760
        %v676 = vsub.f32 %v548, %v675
        %v677 = vand.u32 %v676, 4294901760
        %678 = vmatpush.msra.mxu0 %v677
        %v679 = vand.u32 %v547, 4294901760
        %v680 = vsub.f32 %v547, %v679
        %v681 = vand.u32 %v680, 4294901760
        %682 = vmatpush.msra.mxu0 %v681
        %v683 = vand.u32 %v550, 4294901760
        %684 = vmatmul.f32.gmra.mxu0 %v683
        %v685 = vpop.f32.mrf.mxu0
        %v686 = vadd.f32 %v659, %v685
        %687 = vdwg.mxu0
        %688 = vmatpush.msra.mxu0 0.0
        %689 = vmatpush.msra.mxu0 0.0
        %690 = vmatpush.msra.mxu0 0.0
        %691 = vmatpush.msra.mxu0 0.0
        %692 = vmatpush.msra.mxu0 0.0
        %693 = vmatpush.msra.mxu0 0.0
        %694 = vmatpush.msra.mxu0 0.0
        %695 = vmatpush.msra.mxu0 0.0
        %696 = vmatpush.msra.mxu0 0.0
        %697 = vmatpush.msra.mxu0 0.0
        %698 = vmatpush.msra.mxu0 0.0
        %699 = vmatpush.msra.mxu0 0.0
        %700 = vmatpush.msra.mxu0 0.0
        %701 = vmatpush.msra.mxu0 0.0
        %v702 = vand.u32 %v548, 4294901760
        %703 = vmatpush.msra.mxu0 %v702
        %v704 = vand.u32 %v547, 4294901760
        %705 = vmatpush.msra.mxu0 %v704
        %v706 = vand.u32 %v550, 4294901760
        %707 = vmatmul.f32.gmra.mxu0 %v706
        %v708 = vpop.f32.mrf.mxu0
        %v709 = vadd.f32 %v686, %v708
        %710 = vdwg.mxu0
        %v711 = vadd.f32 %v542, %v709
        %s712 = scalar_lea.vmem %s184, 24 [#allocation2]
        %v713 = vld [vmem:[%s712] sm:$0xff]
        %s714 = scalar_lea.vmem [#allocation5], 48
        %v715 = vld [vmem:[%s714] sm:$0xff]
        %v716 = vld [vmem:[%s714 + $0x8] sm:$0xff]
        %v718 = vsel %vm219, %v713, 0
        %720 = vmatpush.msra.mxu0 0.0
        %721 = vmatpush.msra.mxu0 0.0
        %722 = vmatpush.msra.mxu0 0.0
        %723 = vmatpush.msra.mxu0 0.0
        %724 = vmatpush.msra.mxu0 0.0
        %725 = vmatpush.msra.mxu0 0.0
        %726 = vmatpush.msra.mxu0 0.0
        %727 = vmatpush.msra.mxu0 0.0
        %728 = vmatpush.msra.mxu0 0.0
        %729 = vmatpush.msra.mxu0 0.0
        %730 = vmatpush.msra.mxu0 0.0
        %731 = vmatpush.msra.mxu0 0.0
        %732 = vmatpush.msra.mxu0 0.0
        %733 = vmatpush.msra.mxu0 0.0
        %v734 = vand.u32 %v716, 4294901760
        %735 = vmatpush.msra.mxu0 %v734
        %v736 = vand.u32 %v715, 4294901760
        %737 = vmatpush.msra.mxu0 %v736
        %v738 = vand.u32 %v718, 4294901760
        %v739 = vsub.f32 %v718, %v738
        %v740 = vand.u32 %v739, 4294901760
        %v741 = vsub.f32 %v739, %v740
        %v742 = vand.u32 %v741, 4294901760
        %743 = vmatmul.f32.gmra.mxu0 %v742
        %v744 = vpop.f32.mrf.mxu0
        %v745 = vadd.f32 0.0, %v744
        %746 = vdwg.mxu0
        %747 = vmatpush.msra.mxu0 0.0
        %748 = vmatpush.msra.mxu0 0.0
        %749 = vmatpush.msra.mxu0 0.0
        %750 = vmatpush.msra.mxu0 0.0
        %751 = vmatpush.msra.mxu0 0.0
        %752 = vmatpush.msra.mxu0 0.0
        %753 = vmatpush.msra.mxu0 0.0
        %754 = vmatpush.msra.mxu0 0.0
        %755 = vmatpush.msra.mxu0 0.0
        %756 = vmatpush.msra.mxu0 0.0
        %757 = vmatpush.msra.mxu0 0.0
        %758 = vmatpush.msra.mxu0 0.0
        %759 = vmatpush.msra.mxu0 0.0
        %760 = vmatpush.msra.mxu0 0.0
        %v761 = vand.u32 %v716, 4294901760
        %v762 = vsub.f32 %v716, %v761
        %v763 = vand.u32 %v762, 4294901760
        %v764 = vsub.f32 %v762, %v763
        %v765 = vand.u32 %v764, 4294901760
        %766 = vmatpush.msra.mxu0 %v765
        %v767 = vand.u32 %v715, 4294901760
        %v768 = vsub.f32 %v715, %v767
        %v769 = vand.u32 %v768, 4294901760
        %v770 = vsub.f32 %v768, %v769
        %v771 = vand.u32 %v770, 4294901760
        %772 = vmatpush.msra.mxu0 %v771
        %v773 = vand.u32 %v718, 4294901760
        %774 = vmatmul.f32.gmra.mxu0 %v773
        %v775 = vpop.f32.mrf.mxu0
        %v776 = vadd.f32 %v745, %v775
        %777 = vdwg.mxu0
        %778 = vmatpush.msra.mxu0 0.0
        %779 = vmatpush.msra.mxu0 0.0
        %780 = vmatpush.msra.mxu0 0.0
        %781 = vmatpush.msra.mxu0 0.0
        %782 = vmatpush.msra.mxu0 0.0
        %783 = vmatpush.msra.mxu0 0.0
        %784 = vmatpush.msra.mxu0 0.0
        %785 = vmatpush.msra.mxu0 0.0
        %786 = vmatpush.msra.mxu0 0.0
        %787 = vmatpush.msra.mxu0 0.0
        %788 = vmatpush.msra.mxu0 0.0
        %789 = vmatpush.msra.mxu0 0.0
        %790 = vmatpush.msra.mxu0 0.0
        %791 = vmatpush.msra.mxu0 0.0
        %v792 = vand.u32 %v716, 4294901760
        %v793 = vsub.f32 %v716, %v792
        %794 = vmatpush.msra.mxu0 %v793
        %v795 = vand.u32 %v715, 4294901760
        %v796 = vsub.f32 %v715, %v795
        %797 = vmatpush.msra.mxu0 %v796
        %v798 = vand.u32 %v718, 4294901760
        %v799 = vsub.f32 %v718, %v798
        %800 = vmatmul.f32.gmra.mxu0 %v799
        %v801 = vpop.f32.mrf.mxu0
        %v802 = vadd.f32 %v776, %v801
        %803 = vdwg.mxu0
        %804 = vmatpush.msra.mxu0 0.0
        %805 = vmatpush.msra.mxu0 0.0
        %806 = vmatpush.msra.mxu0 0.0
        %807 = vmatpush.msra.mxu0 0.0
        %808 = vmatpush.msra.mxu0 0.0
        %809 = vmatpush.msra.mxu0 0.0
        %810 = vmatpush.msra.mxu0 0.0
        %811 = vmatpush.msra.mxu0 0.0
        %812 = vmatpush.msra.mxu0 0.0
        %813 = vmatpush.msra.mxu0 0.0
        %814 = vmatpush.msra.mxu0 0.0
        %815 = vmatpush.msra.mxu0 0.0
        %816 = vmatpush.msra.mxu0 0.0
        %817 = vmatpush.msra.mxu0 0.0
        %v818 = vand.u32 %v716, 4294901760
        %819 = vmatpush.msra.mxu0 %v818
        %v820 = vand.u32 %v715, 4294901760
        %821 = vmatpush.msra.mxu0 %v820
        %v822 = vand.u32 %v718, 4294901760
        %v823 = vsub.f32 %v718, %v822
        %v824 = vand.u32 %v823, 4294901760
        %825 = vmatmul.f32.gmra.mxu0 %v824
        %v826 = vpop.f32.mrf.mxu0
        %v827 = vadd.f32 %v802, %v826
        %828 = vdwg.mxu0
        %829 = vmatpush.msra.mxu0 0.0
        %830 = vmatpush.msra.mxu0 0.0
        %831 = vmatpush.msra.mxu0 0.0
        %832 = vmatpush.msra.mxu0 0.0
        %833 = vmatpush.msra.mxu0 0.0
        %834 = vmatpush.msra.mxu0 0.0
        %835 = vmatpush.msra.mxu0 0.0
        %836 = vmatpush.msra.mxu0 0.0
        %837 = vmatpush.msra.mxu0 0.0
        %838 = vmatpush.msra.mxu0 0.0
        %839 = vmatpush.msra.mxu0 0.0
        %840 = vmatpush.msra.mxu0 0.0
        %841 = vmatpush.msra.mxu0 0.0
        %842 = vmatpush.msra.mxu0 0.0
        %v843 = vand.u32 %v716, 4294901760
        %v844 = vsub.f32 %v716, %v843
        %v845 = vand.u32 %v844, 4294901760
        %846 = vmatpush.msra.mxu0 %v845
        %v847 = vand.u32 %v715, 4294901760
        %v848 = vsub.f32 %v715, %v847
        %v849 = vand.u32 %v848, 4294901760
        %850 = vmatpush.msra.mxu0 %v849
        %v851 = vand.u32 %v718, 4294901760
        %852 = vmatmul.f32.gmra.mxu0 %v851
        %v853 = vpop.f32.mrf.mxu0
        %v854 = vadd.f32 %v827, %v853
        %855 = vdwg.mxu0
        %856 = vmatpush.msra.mxu0 0.0
        %857 = vmatpush.msra.mxu0 0.0
        %858 = vmatpush.msra.mxu0 0.0
        %859 = vmatpush.msra.mxu0 0.0
        %860 = vmatpush.msra.mxu0 0.0
        %861 = vmatpush.msra.mxu0 0.0
        %862 = vmatpush.msra.mxu0 0.0
        %863 = vmatpush.msra.mxu0 0.0
        %864 = vmatpush.msra.mxu0 0.0
        %865 = vmatpush.msra.mxu0 0.0
        %866 = vmatpush.msra.mxu0 0.0
        %867 = vmatpush.msra.mxu0 0.0
        %868 = vmatpush.msra.mxu0 0.0
        %869 = vmatpush.msra.mxu0 0.0
        %v870 = vand.u32 %v716, 4294901760
        %871 = vmatpush.msra.mxu0 %v870
        %v872 = vand.u32 %v715, 4294901760
        %873 = vmatpush.msra.mxu0 %v872
        %v874 = vand.u32 %v718, 4294901760
        %875 = vmatmul.f32.gmra.mxu0 %v874
        %v876 = vpop.f32.mrf.mxu0
        %v877 = vadd.f32 %v854, %v876
        %878 = vdwg.mxu0
        %v879 = vadd.f32 %v711, %v877
        %vm880 = vcmask 523264
        %881 = vst.msk [vmem:[%s210] sm:$0xff] %vm880, %v879
        %s882 = sand.u32 %s102, 1
        %s883 = scalar_lea.sflag [#allocation4], %s882
        %s884 = sand.u32 %s102, 1
        %s885 = smul.addr %s884, 8
        %s886 = scalar_lea.vmem [#allocation7], %s885
        // Predicated region
        $region37: #{tpu_custom_call.1} parent=27 // pred_check
          %p887 = pneg %p112
        $region38: #{tpu_custom_call.1} parent=27 // pred_check_branch
          %889 = sbr.rel (%p887) target = $region40
        $region39: #{tpu_custom_call.1} parent=27 // pred_region
          %891 = vsyncadd %s883, 0
          %s892 = smul.addr %s26, 2
          %s893 = sadd.s32 %s27, %s892
          %s894 = smul.addr %s25, 2
          %s895 = sadd.s32 %s893, %s894
          %s896 = smul.addr %s895, 8
          %s897 = scalar_lea.hbm %s2, %s896
          %s899 = sshll.u32 %s886, 4
          %s900 = int_to_ptr.vmem [resolvable:$true] %s899
          %s901 = sshll.u32 %s897, 4
          %s902 = int_to_ptr.hbm [resolvable:$true] %s901
          %904 = dma.vmem_to_hbm [thread:$0]  %s900, 128, %s902, %s883
        $region40: #{tpu_custom_call.1} parent=27 // pred_fallthru
          _
      $region28: #{tpu_custom_call.1} parent=5 // pred_fallthru
        _
      %p905 = scmp.le.s32.totalorder 2, %s15
      // Predicated region
      $region41: #{tpu_custom_call.1} parent=5 // pred_check
        %p906 = pneg %p905
      $region42: #{tpu_custom_call.1} parent=5 // pred_check_branch
        %908 = sbr.rel (%p906) target = $region44
      $region43: #{tpu_custom_call.1} parent=5 // pred_region
        %s909 = ssub.s32 %s15, 2
        // Predicated region
        $region45: #{tpu_custom_call.1} parent=43 // pred_check
          %p910 = pneg %p118
        $region46: #{tpu_custom_call.1} parent=43 // pred_check_branch
          %912 = sbr.rel (%p910) target = $region48
        $region47: #{tpu_custom_call.1} parent=43 // pred_region
          %s913 = sand.u32 %s103, 1
          %s914 = scalar_lea.sflag [#allocation4], %s913
          %s915 = sand.u32 %s103, 1
          %s916 = smul.addr %s915, 8
          %s917 = scalar_lea.vmem [#allocation7], %s916
          %919 = dma.done %s914, 128
        $region48: #{tpu_custom_call.1} parent=43 // pred_fallthru
          _
      $region44: #{tpu_custom_call.1} parent=5 // pred_fallthru
        _
    $region6: #{tpu_custom_call.1} parent=1 // loop_footer
      %s19 = sadd.s32 1, %s15
    $region7: #{tpu_custom_call.1} parent=1 // loop_footer_branch
      %14 = sbr.rel target = $region3
    $region8: #{tpu_custom_call.1} parent=1 // loop_exit
      _
    %920 = vsyncpa [#allocation3], 1
    %s921 = scalar_lea.sflag [#allocation3], 1
    %922 = vsyncpa %s921, 1
    %923 = vsyncpa [#allocation6], 1
    %924 = vsyncpa [#allocation4], 1
    %s925 = scalar_lea.sflag [#allocation4], 1
    %926 = vsyncpa %s925, 1

</llo_original>
